<compile_context>
chip_gen: v6e
topology: v6e:2x2x1
jax: 0.10.0
libtpu: 0.0.40
codegen_flags: <defaults>
</compile_context>

<pallas_src>
import functools

import jax
import jax.numpy as jnp
from jax.experimental import pallas as pl
from jax.experimental.pallas import tpu as pltpu

_LANES = 128
_SUBLANES = 8
_MAX_BLOCK_ROWS = 4096   # 4096 x 128 f32 = 2 MiB per input per pipeline buffer
_CHUNK_ROWS = 256        # in-kernel accumulation chunk (256 x 128 f32 = 32 vregs)
_MIN_GRID_BLOCKS = 4     # keep both v7x TensorCores fed whenever possible


def _bce_terms(p, sy):
    """PyTorch nn.BCELoss element: -(sy*log(p) + (1-sy)*log(1-p)), logs clamped at -100."""
    log_p = jnp.maximum(jnp.log(p), -100.0)
    log_1mp = jnp.maximum(jnp.log(1.0 - p), -100.0)
    # Rewritten to save one multiply per element:
    #   -(sy*log_p + (1-sy)*log_1mp) == -(log_1mp + sy*(log_p - log_1mp))
    return -(log_1mp + sy * (log_p - log_1mp))


def _bce_smooth_kernel(p_ref, y_ref, o_ref, *, one_minus_s, smooth_add,
                       block_rows, chunk_rows, main_rows):
    """One (block_rows, 128) tile -> one lane-dense (8, 128) partial sum.

    The tile is consumed in (chunk_rows, 128) pieces inside a fori_loop so the
    live f32 intermediates stay at ~a-few-dozen vregs regardless of how large
    the pipelined block is.  Each chunk's loss is reduced with pure VPU vreg
    adds ((c,8,128).sum(axis=0)); the single scalar reduce happens in the
    wrapper.
    """
    pid = pl.program_id(0)
    # Only the last grid block can be partial; valid_rows == block_rows elsewhere.
    valid_rows = jnp.minimum(block_rows, main_rows - pid * block_rows)
    num_chunks = block_rows // chunk_rows

    # Hoisted out of the loop (broadcast_in_dim is not CSE'd by JAX).
    row_in_chunk = jax.lax.broadcasted_iota(jnp.int32, (chunk_rows, _LANES), 0)

    def chunk_body(c, acc):
        off = pl.multiple_of(c * chunk_rows, _SUBLANES)
        p = p_ref[pl.ds(off, chunk_rows), :].astype(jnp.float32)   # bf16-friendly
        y = y_ref[pl.ds(off, chunk_rows), :].astype(jnp.float32)
        sy = y * one_minus_s + smooth_add      # label smoothing (constants folded)
        loss = _bce_terms(p, sy)
        # Mask rows past the valid data.  MUST stay a select (not multiply-by-
        # mask): OOB padding can make log() produce NaN/Inf, which a select
        # discards but a multiply would propagate.
        loss = jnp.where(row_in_chunk < (valid_rows - c * chunk_rows), loss, 0.0)
        partial = loss.reshape(chunk_rows // _SUBLANES, _SUBLANES, _LANES).sum(axis=0)
        return acc + partial

    acc = jax.lax.fori_loop(
        0, num_chunks, chunk_body,
        jnp.zeros((_SUBLANES, _LANES), jnp.float32),
        unroll=True,   # short fixed trip count (<= 16): give LLO full visibility
    )
    o_ref[...] = acc


def bce_smooth_loss(predictions, bi_labels=None, smoothing=0.0):
    """JAX/Pallas equivalent of BCESmoothLoss.forward."""
    if bi_labels is None:
        return jnp.array([0.0], dtype=jnp.float32)

    assert predictions.shape == bi_labels.shape
    smoothing = float(smoothing)
    last_dim = bi_labels.shape[-1]               # bi_labels.size(-1)
    one_minus_s = 1.0 - smoothing
    smooth_add = smoothing / float(last_dim)
    total = predictions.size

    p_flat = predictions.reshape(-1)             # free bitcast, keeps input dtype
    y_flat = bi_labels.reshape(-1)

    def _plain_sum(p, y):
        sy = y.astype(jnp.float32) * one_minus_s + smooth_add
        return jnp.sum(_bce_terms(p.astype(jnp.float32), sy))

    main_rows = total // _LANES
    if main_rows < _SUBLANES:
        # Tiny input (< 1024 elements): not worth a kernel launch.
        return _plain_sum(p_flat, y_flat) / total

    tail = total - main_rows * _LANES
    if tail == 0:
        p2 = p_flat.reshape(main_rows, _LANES)   # free bitcast, zero extra HBM traffic
        y2 = y_flat.reshape(main_rows, _LANES)
        tail_contrib = 0.0
    else:
        # TODO(synk): copy-free ragged path (flat 1-D BlockSpec + in-kernel
        # (N,)->(N//128,128) reshape) once Mosaic reliably lowers that reshape;
        # for now the aligned prefix is sliced (one copy, ragged shapes only)
        # and the <128-element tail is summed in plain JAX.
        p2 = p_flat[: main_rows * _LANES].reshape(main_rows, _LANES)
        y2 = y_flat[: main_rows * _LANES].reshape(main_rows, _LANES)
        tail_contrib = _plain_sum(p_flat[main_rows * _LANES:],
                                  y_flat[main_rows * _LANES:])

    # block_rows: multiple of 8, <= main_rows, capped at 4096 rows for VMEM,
    # and small enough that the "parallel" grid has >= _MIN_GRID_BLOCKS blocks
    # whenever main_rows permits (so both v7x TensorCores get work).
    split_rows = max(
        _SUBLANES,
        (pl.cdiv(main_rows, _MIN_GRID_BLOCKS) // _SUBLANES) * _SUBLANES,
    )
    block_rows = min(_MAX_BLOCK_ROWS, split_rows)
    if block_rows >= _CHUNK_ROWS:
        block_rows = (block_rows // _CHUNK_ROWS) * _CHUNK_ROWS  # whole chunks only
        chunk_rows = _CHUNK_ROWS
    else:
        chunk_rows = block_rows                                  # single chunk
    num_blocks = pl.cdiv(main_rows, block_rows)

    kernel = functools.partial(
        _bce_smooth_kernel,
        one_minus_s=one_minus_s,
        smooth_add=smooth_add,
        block_rows=block_rows,
        chunk_rows=chunk_rows,
        main_rows=main_rows,
    )

    kernel_elems = main_rows * _LANES
    in_bytes = kernel_elems * (p2.dtype.itemsize + y2.dtype.itemsize)
    out_bytes = 4 * num_blocks * _SUBLANES * _LANES

    partials = pl.pallas_call(
        kernel,
        out_shape=jax.ShapeDtypeStruct((num_blocks * _SUBLANES, _LANES), jnp.float32),
        grid=(num_blocks,),
        in_specs=[
            pl.BlockSpec((block_rows, _LANES), lambda i: (i, 0)),
            pl.BlockSpec((block_rows, _LANES), lambda i: (i, 0)),
        ],
        out_specs=pl.BlockSpec((_SUBLANES, _LANES), lambda i: (i, 0)),
        compiler_params=pltpu.CompilerParams(
            dimension_semantics=("parallel",),
            # 8 MiB of double-buffered input tiles + scratch: comfortably under
            # this, but v5e's 16 MiB default scoped limit is tight, so be explicit.
            vmem_limit_bytes=32 * 1024 * 1024,
        ),
        cost_estimate=pl.CostEstimate(
            flops=8 * kernel_elems,
            transcendentals=2 * kernel_elems,     # two log() per element
            bytes_accessed=in_bytes + out_bytes,
        ),
    )(p2, y2)

    # Tiny final reduce + multiply-by-1/count in the wrapper.
    return (jnp.sum(partials) + tail_contrib) / total


def _reference(predictions, bi_labels, smoothing):
    """Pure-JAX reference mirroring torch.nn.BCELoss (mean) + label smoothing."""
    p = predictions.astype(jnp.float32)
    y = bi_labels.astype(jnp.float32)
    sy = y * (1.0 - smoothing) + smoothing / bi_labels.shape[-1]
    log_p = jnp.maximum(jnp.log(p), -100.0)
    log_1mp = jnp.maximum(jnp.log(1.0 - p), -100.0)
    return jnp.mean(-(sy * log_p + (1.0 - sy) * log_1mp))


if __name__ == "__main__":
    key = jax.random.PRNGKey(0)
    k1, k2, k3, k4 = jax.random.split(key, 4)
    smoothing = 0.1

    # Primary NCHW case: batch=2, channels=4, spatial=16x16 (2048 elements,
    # 128-aligned -> zero-copy kernel path, 2-block "parallel" grid).
    shape = (2, 4, 16, 16)
    predictions = jax.nn.sigmoid(jax.random.normal(k1, shape, dtype=jnp.float32))
    bi_labels = (jax.random.uniform(k2, shape) > 0.5).astype(jnp.float32)
    loss = jax.block_until_ready(
        bce_smooth_loss(predictions, bi_labels, smoothing=smoothing))
    ref = _reference(predictions, bi_labels, smoothing)
    assert jnp.allclose(loss, ref, rtol=1e-4, atol=1e-5), (loss, ref)

    # Ragged case: exercises the multi-block grid, in-kernel last-block row
    # masking (select), and the <128-element plain-JAX tail.
    shape2 = (3, 5, 9, 11)
    p_r = jax.nn.sigmoid(jax.random.normal(k3, shape2, dtype=jnp.float32))
    y_r = (jax.random.uniform(k4, shape2) > 0.5).astype(jnp.float32)
    loss2 = jax.block_until_ready(bce_smooth_loss(p_r, y_r, smoothing=smoothing))
    ref2 = _reference(p_r, y_r, smoothing)
    assert jnp.allclose(loss2, ref2, rtol=1e-4, atol=1e-5), (loss2, ref2)

    # Larger 128-aligned case: exercises the multi-chunk fori_loop accumulator
    # and the >=4-block grid selection (main_rows = 512, block_rows = 128).
    shape3 = (8, 8, 32, 32)
    p_l = jax.nn.sigmoid(jax.random.normal(k1, shape3, dtype=jnp.float32))
    y_l = (jax.random.uniform(k2, shape3) > 0.5).astype(jnp.float32)
    loss3 = jax.block_until_ready(bce_smooth_loss(p_l, y_l, smoothing=smoothing))
    ref3 = _reference(p_l, y_l, smoothing)
    assert jnp.allclose(loss3, ref3, rtol=1e-4, atol=1e-5), (loss3, ref3)

    # bi_labels=None path (matches torch.tensor([0.0])).
    none_out = jax.block_until_ready(bce_smooth_loss(predictions, None))
    assert none_out.shape == (1,) and float(none_out[0]) == 0.0

    print("KERNEL_OK")
</pallas_src>

<mosaic_0001>
module attributes {stable_mosaic.version = 11 : i64} {
  func.func @_bce_smooth_kernel(%arg0: i32, %arg1: memref<8x128xf32, #tpu.memory_space<vmem>>, %arg2: memref<8x128xf32, #tpu.memory_space<vmem>>, %arg3: memref<8x128xf32, #tpu.memory_space<vmem>>) attributes {dimension_semantics = [#tpu.dimension_semantics<parallel>], iteration_bounds = array<i64: 2>, scalar_prefetch = 0 : i64, scratch_operands = 0 : i64, tpu.core_type = #tpu.core_type<tc>, window_params = [{transform_indices = @transform_0, window_bounds = array<i64: 8, 128>}, {transform_indices = @transform_1, window_bounds = array<i64: 8, 128>}, {transform_indices = @transform_2, window_bounds = array<i64: 8, 128>}]} {
    %c8_i32 = arith.constant 8 : i32
    %0 = arith.muli %arg0, %c8_i32 : i32
    %c16_i32 = arith.constant 16 : i32
    %1 = arith.subi %c16_i32, %0 : i32
    %c8_i32_0 = arith.constant 8 : i32
    %2 = arith.minsi %c8_i32_0, %1 : i32
    %3 = tpu.iota {dimensions = array<i32: 0>} : vector<8x128xi32>
    %cst = arith.constant 0.000000e+00 : f32
    %4 = vector.broadcast %cst : f32 to vector<8x128xf32>
    %c0_i32 = arith.constant 0 : i32
    %c8_i32_1 = arith.constant 8 : i32
    %5 = arith.muli %c0_i32, %c8_i32_1 : i32
    %6 = tpu.assume_multiple %5, 8 : i32
    %7 = arith.index_cast %6 : i32 to index
    %c0 = arith.constant 0 : index
    %8 = vector.load %arg1[%7, %c0] : memref<8x128xf32, #tpu.memory_space<vmem>>, vector<8x128xf32>
    %9 = arith.index_cast %6 : i32 to index
    %c0_2 = arith.constant 0 : index
    %10 = vector.load %arg2[%9, %c0_2] : memref<8x128xf32, #tpu.memory_space<vmem>>, vector<8x128xf32>
    %cst_3 = arith.constant 0.899999976 : f32
    %11 = vector.broadcast %cst_3 : f32 to vector<8x128xf32>
    %12 = arith.mulf %10, %11 : vector<8x128xf32>
    %cst_4 = arith.constant 6.250000e-03 : f32
    %13 = vector.broadcast %cst_4 : f32 to vector<8x128xf32>
    %14 = arith.addf %12, %13 : vector<8x128xf32>
    %15 = math.log %8 : vector<8x128xf32>
    %cst_5 = arith.constant -1.000000e+02 : f32
    %16 = vector.broadcast %cst_5 : f32 to vector<8x128xf32>
    %17 = arith.maximumf %15, %16 : vector<8x128xf32>
    %cst_6 = arith.constant 1.000000e+00 : f32
    %18 = vector.broadcast %cst_6 : f32 to vector<8x128xf32>
    %19 = arith.subf %18, %8 : vector<8x128xf32>
    %20 = math.log %19 : vector<8x128xf32>
    %cst_7 = arith.constant -1.000000e+02 : f32
    %21 = vector.broadcast %cst_7 : f32 to vector<8x128xf32>
    %22 = arith.maximumf %20, %21 : vector<8x128xf32>
    %23 = arith.subf %17, %22 : vector<8x128xf32>
    %24 = arith.mulf %14, %23 : vector<8x128xf32>
    %25 = arith.addf %22, %24 : vector<8x128xf32>
    %cst_8 = arith.constant 0.000000e+00 : f32
    %26 = vector.broadcast %cst_8 : f32 to vector<8x128xf32>
    %27 = arith.subf %26, %25 : vector<8x128xf32>
    %c8_i32_9 = arith.constant 8 : i32
    %28 = arith.muli %c0_i32, %c8_i32_9 : i32
    %29 = arith.subi %2, %28 : i32
    %30 = vector.broadcast %29 : i32 to vector<8x128xi32>
    %31 = arith.cmpi slt, %3, %30 : vector<8x128xi32>
    %cst_10 = arith.constant 0.000000e+00 : f32
    %32 = vector.broadcast %cst_10 : f32 to vector<8x128xf32>
    %33 = arith.select %31, %27, %32 : vector<8x128xi1>, vector<8x128xf32>
    %34 = vector.shape_cast %33 : vector<8x128xf32> to vector<1x8x128xf32>
    %cst_11 = arith.constant dense<0.000000e+00> : vector<8x128xf32>
    %35 = vector.multi_reduction <add>, %34, %cst_11 [0] : vector<1x8x128xf32> to vector<8x128xf32>
    %36 = arith.addf %4, %35 : vector<8x128xf32>
    %c1_i32 = arith.constant 1 : i32
    %c0_12 = arith.constant 0 : index
    %c0_13 = arith.constant 0 : index
    %37 = vector.load %arg3[%c0_12, %c0_13] : memref<8x128xf32, #tpu.memory_space<vmem>>, vector<8x128xf32>
    tpu.vector_store %arg3[%c0_12, %c0_13], %36 {strides = array<i32>} : memref<8x128xf32, #tpu.memory_space<vmem>>, vector<8x128xf32>,
    return
  }
  func.func @transform_0(%arg0: i32) -> (i32, i32) {
    %c0_i32 = arith.constant 0 : i32
    %c0_i32_0 = arith.constant 0 : i32
    return %arg0, %c0_i32 : i32, i32
  }
  func.func @transform_1(%arg0: i32) -> (i32, i32) {
    %c0_i32 = arith.constant 0 : i32
    %c0_i32_0 = arith.constant 0 : i32
    return %arg0, %c0_i32 : i32, i32
  }
  func.func @transform_2(%arg0: i32) -> (i32, i32) {
    %c0_i32 = arith.constant 0 : i32
    %c0_i32_0 = arith.constant 0 : i32
    return %arg0, %c0_i32 : i32, i32
  }
}

</mosaic_0001>

<llo_original>
// kernel: tpu_custom_call.1
$region0: #{tpu_custom_call.1}
  #allocation0 [shape = 'u32[]', space=smem, size = 0x4, offset = 0x4, fixed_abs, tag = 'smem constant byte address 0x4 - core index']
  #allocation1 [shape = 'u32[144,128]{1,0:T(1,128)}', space=vmem, size = 0x12000, scoped, tag = 'internal scratch']
  %s0 = inlined_call_operand.hbm [shape: f32[16,128], index: 0, kind: input, shape index: {}]
  %s1 = inlined_call_operand.hbm [shape: f32[16,128], index: 1, kind: input, shape index: {}]
  %s2 = inlined_call_operand.hbm [shape: f32[16,128], index: 2, kind: output, shape index: {}]
  %s3 = sld [smem:[#allocation0]]
  $region49: #{tpu_custom_call.1} parent=0
    _
  %s5 = ssub.s32 1, %s3
  %s6 = scalar_select 0, %s5, %s3
  $region1: #{tpu_custom_call.1} parent=0
    #allocation2 [shape = 'u8[8192]{0}', space=vmem, size = 0x2000, scoped, tag = 'input window, operand 0']
    #allocation3 [shape = 's32[2]{0}', space=sflag, size = 0x8, scoped, tag = 'scoped memory for tpu_custom_call.1']
    #allocation4 [shape = 's32[2]{0}', space=sflag, size = 0x8, scoped, tag = 'scoped memory for tpu_custom_call.1']
    #allocation5 [shape = 'u8[8192]{0}', space=vmem, size = 0x2000, scoped, tag = 'input window, operand 1']
    #allocation6 [shape = 's32[2]{0}', space=sflag, size = 0x8, scoped, tag = 'scoped memory for tpu_custom_call.1']
    #allocation7 [shape = 'u8[8192]{0}', space=vmem, size = 0x2000, scoped, tag = 'output window, operand 0']
    %7 = vsyncpa [#allocation3], 0
    %s8 = scalar_lea.sflag [#allocation3], 1
    %9 = vsyncpa %s8, 0
    %10 = vsyncpa [#allocation6], 0
    %s11 = scalar_lea.sflag [#allocation6], 1
    %12 = vsyncpa %s11, 0
    %13 = vsyncpa [#allocation4], 0
    %s14 = scalar_lea.sflag [#allocation4], 1
    %15 = vsyncpa %s14, 0
    loop: start=0, step=1, limit=4
    $region2: #{tpu_custom_call.1} parent=1 // loop_pre_header
      _
    $region3: #{tpu_custom_call.1} parent=1 // loop_header
      %s17 = sphi 0, %s21
      %p18 = scmp.ge.s32.totalorder %s17, 4
      %s27 = sphi 0, %s29
      %s30 = sphi 0, %s27
      %s31 = sphi 0, %s30
      %s47 = sphi 0, %s31
      %s53 = sphi 0, %s55
      %s56 = sphi 0, %s53
      %s57 = sphi 0, %s56
      %s73 = sphi 0, %s57
      %s79 = sphi 0, %s81
      %s82 = sphi 0, %s79
      %s83 = sphi 0, %s82
      %s99 = sphi 0, %s83
    $region4: #{tpu_custom_call.1} parent=1 // loop_header_branch
      %20 = sbr.rel (%p18) target = $region8
    $region5: #{tpu_custom_call.1} parent=1 // loop_body
      %s22 = ssub.s32 %s17, 1
      %s23 = ssub.s32 %s17, 2
      %s24 = sadd.s32 %s17, 1
      %s25 = ssub.s32 %s17, %s24
      %p26 = scmp.eq.s32.totalorder %s25, 0
      %s28 = sadd.s32 %s27, 1
      %s29 = scalar_select %p26, %s27, %s28
      %p32 = pneg %p26
      %p33 = scmp.eq.s32.totalorder %s17, 1
      %p34 = por %p32, %p33
      %p35 = scmp.ne.s32.totalorder %s27, %s30
      %p36 = scmp.eq.s32.totalorder %s17, 0
      %p37 = por %p35, %p36
      %p38 = scmp.ne.s32.totalorder %s27, %s30
      %p39 = scmp.eq.s32.totalorder %s22, 1
      %p40 = por %p38, %p39
      %p41 = scmp.ne.s32.totalorder %s30, %s31
      %p42 = scmp.eq.s32.totalorder %s22, 0
      %p43 = por %p41, %p42
      %p44 = scmp.ne.s32.totalorder %s30, %s31
      %p45 = scmp.eq.s32.totalorder %s23, 1
      %p46 = por %p44, %p45
      %p48 = scmp.ne.s32.totalorder %s31, %s47
      %p49 = scmp.eq.s32.totalorder %s23, 0
      %p50 = por %p48, %p49
      %s51 = ssub.s32 %s17, %s24
      %p52 = scmp.eq.s32.totalorder %s51, 0
      %s54 = sadd.s32 %s53, 1
      %s55 = scalar_select %p52, %s53, %s54
      %p58 = pneg %p52
      %p59 = scmp.eq.s32.totalorder %s17, 1
      %p60 = por %p58, %p59
      %p61 = scmp.ne.s32.totalorder %s53, %s56
      %p62 = scmp.eq.s32.totalorder %s17, 0
      %p63 = por %p61, %p62
      %p64 = scmp.ne.s32.totalorder %s53, %s56
      %p65 = scmp.eq.s32.totalorder %s22, 1
      %p66 = por %p64, %p65
      %p67 = scmp.ne.s32.totalorder %s56, %s57
      %p68 = scmp.eq.s32.totalorder %s22, 0
      %p69 = por %p67, %p68
      %p70 = scmp.ne.s32.totalorder %s56, %s57
      %p71 = scmp.eq.s32.totalorder %s23, 1
      %p72 = por %p70, %p71
      %p74 = scmp.ne.s32.totalorder %s57, %s73
      %p75 = scmp.eq.s32.totalorder %s23, 0
      %p76 = por %p74, %p75
      %s77 = ssub.s32 %s17, %s24
      %p78 = scmp.eq.s32.totalorder %s77, 0
      %s80 = sadd.s32 %s79, 1
      %s81 = scalar_select %p78, %s79, %s80
      %p84 = pneg %p78
      %p85 = scmp.eq.s32.totalorder %s17, 1
      %p86 = por %p84, %p85
      %p87 = scmp.ne.s32.totalorder %s79, %s82
      %p88 = scmp.eq.s32.totalorder %s17, 0
      %p89 = por %p87, %p88
      %p90 = scmp.ne.s32.totalorder %s79, %s82
      %p91 = scmp.eq.s32.totalorder %s22, 1
      %p92 = por %p90, %p91
      %p93 = scmp.ne.s32.totalorder %s82, %s83
      %p94 = scmp.eq.s32.totalorder %s22, 0
      %p95 = por %p93, %p94
      %p96 = scmp.ne.s32.totalorder %s82, %s83
      %p97 = scmp.eq.s32.totalorder %s23, 1
      %p98 = por %p96, %p97
      %p100 = scmp.ne.s32.totalorder %s83, %s99
      %p101 = scmp.eq.s32.totalorder %s23, 0
      %p102 = por %p100, %p101
      %p103 = scmp.le.s32.totalorder 1, %s17
      %p104 = scmp.lt.s32.totalorder %s17, 3
      %p105 = pnand %p103, %p104
      %p106 = pneg %p105
      // Predicated region
      $region9: #{tpu_custom_call.1} parent=5 // pred_check
        _
      $region10: #{tpu_custom_call.1} parent=5 // pred_check_branch
        %108 = sbr.rel (%p105) target = $region12
      $region11: #{tpu_custom_call.1} parent=5 // pred_region
        %s109 = ssub.s32 %s17, 1
      $region12: #{tpu_custom_call.1} parent=5 // pred_fallthru
        _
      %p110 = scmp.lt.s32.totalorder %s17, 2
      // Predicated region
      $region13: #{tpu_custom_call.1} parent=5 // pred_check
        %p111 = pneg %p110
      $region14: #{tpu_custom_call.1} parent=5 // pred_check_branch
        %113 = sbr.rel (%p111) target = $region16
      $region15: #{tpu_custom_call.1} parent=5 // pred_region
        // Predicated region
        $region17: #{tpu_custom_call.1} parent=15 // pred_check
          %p114 = pneg %p37
        $region18: #{tpu_custom_call.1} parent=15 // pred_check_branch
          %116 = sbr.rel (%p114) target = $region20
        $region19: #{tpu_custom_call.1} parent=15 // pred_region
          %s117 = sand.u32 %s27, 1
          %s118 = scalar_lea.sflag [#allocation3], %s117
          %s119 = sand.u32 %s27, 1
          %s120 = smul.addr %s119, 8
          %s121 = scalar_lea.vmem [#allocation2], %s120
          %s123 = ssub.s32 128, 128
          %124 = vsyncadd %s118, %s123
          %s125 = smul.addr %s17, 128
          %s126 = scalar_lea.hbm %s0, %s125
          %s128 = sshll.u32 %s121, 4
          %s129 = int_to_ptr.vmem [resolvable:$true] %s128
          %131 = dma.hbm_to_vmem [thread:$0]  %s126, 128, %s129, %s118
        $region20: #{tpu_custom_call.1} parent=15 // pred_fallthru
          _
        // Predicated region
        $region21: #{tpu_custom_call.1} parent=15 // pred_check
          %p132 = pneg %p63
        $region22: #{tpu_custom_call.1} parent=15 // pred_check_branch
          %134 = sbr.rel (%p132) target = $region24
        $region23: #{tpu_custom_call.1} parent=15 // pred_region
          %s135 = sand.u32 %s53, 1
          %s136 = scalar_lea.sflag [#allocation6], %s135
          %s137 = sand.u32 %s53, 1
          %s138 = smul.addr %s137, 8
          %s139 = scalar_lea.vmem [#allocation5], %s138
          %s141 = ssub.s32 128, 128
          %142 = vsyncadd %s136, %s141
          %s143 = smul.addr %s17, 128
          %s144 = scalar_lea.hbm %s1, %s143
          %s146 = sshll.u32 %s139, 4
          %s147 = int_to_ptr.vmem [resolvable:$true] %s146
          %149 = dma.hbm_to_vmem [thread:$0]  %s144, 128, %s147, %s136
        $region24: #{tpu_custom_call.1} parent=15 // pred_fallthru
          _
      $region16: #{tpu_custom_call.1} parent=5 // pred_fallthru
        _
      %p150 = scmp.le.s32.totalorder 1, %s17
      %p151 = scmp.lt.s32.totalorder %s17, 3
      %p152 = pnand %p150, %p151
      %p153 = pneg %p152
      // Predicated region
      $region25: #{tpu_custom_call.1} parent=5 // pred_check
        _
      $region26: #{tpu_custom_call.1} parent=5 // pred_check_branch
        %155 = sbr.rel (%p152) target = $region28
      $region27: #{tpu_custom_call.1} parent=5 // pred_region
        %s156 = ssub.s32 %s17, 1
        %s157 = sand.u32 %s30, 1
        %s158 = scalar_lea.sflag [#allocation3], %s157
        %s159 = sand.u32 %s30, 1
        %s160 = smul.addr %s159, 8
        %s161 = scalar_lea.vmem [#allocation2], %s160
        // Predicated region
        $region29: #{tpu_custom_call.1} parent=27 // pred_check
          %p162 = pneg %p43
        $region30: #{tpu_custom_call.1} parent=27 // pred_check_branch
          %164 = sbr.rel (%p162) target = $region32
        $region31: #{tpu_custom_call.1} parent=27 // pred_region
          %165 = dma.done %s158, 128
        $region32: #{tpu_custom_call.1} parent=27 // pred_fallthru
          _
        %s166 = sand.u32 %s56, 1
        %s167 = scalar_lea.sflag [#allocation6], %s166
        %s168 = sand.u32 %s56, 1
        %s169 = smul.addr %s168, 8
        %s170 = scalar_lea.vmem [#allocation5], %s169
        // Predicated region
        $region33: #{tpu_custom_call.1} parent=27 // pred_check
          %p171 = pneg %p69
        $region34: #{tpu_custom_call.1} parent=27 // pred_check_branch
          %173 = sbr.rel (%p171) target = $region36
        $region35: #{tpu_custom_call.1} parent=27 // pred_region
          %174 = dma.done %s167, 128
        $region36: #{tpu_custom_call.1} parent=27 // pred_fallthru
          _
        %s175 = sand.u32 %s30, 1
        %s176 = scalar_lea.sflag [#allocation3], %s175
        %s177 = sand.u32 %s30, 1
        %s178 = smul.addr %s177, 8
        %s179 = scalar_lea.vmem [#allocation2], %s178
        %p180 = pneg %p43
        %p181 = pneg %p40
        %s182 = sand.u32 %s56, 1
        %s183 = scalar_lea.sflag [#allocation6], %s182
        %s184 = sand.u32 %s56, 1
        %s185 = smul.addr %s184, 8
        %s186 = scalar_lea.vmem [#allocation5], %s185
        %p187 = pneg %p69
        %p188 = pneg %p66
        %p189 = pneg %p95
        %p190 = pneg %p92
        %s191 = sand.u32 %s82, 1
        %s192 = scalar_lea.sflag [#allocation4], %s191
        %s193 = sand.u32 %s82, 1
        %s194 = smul.addr %s193, 8
        %s195 = scalar_lea.vmem [#allocation7], %s194
        %s196 = smul.u32 %s22, 8
        %s197 = ssub.s32 16, %s196
        %p198 = scmp.lt.s32.totalorder %s197, 8
        %s199 = scalar_select %p198, %s197, 8
        %v200 = vlaneseq
        %v201 = vshrl.u32 %v200, 7
        %v202 = vld [vmem:[%s161] sm:$0xff]
        %v203 = vld [vmem:[%s170] sm:$0xff]
        %v204 = vmul.f32 %v203, 0.9
        %v205 = vadd.f32 %v204, 0.00625
        %v206 = vlog2.pop %v202
        %v207 = vmul.f32 %v206, 0.6931472
        %v208 = vmax.f32 %v207, -100.0
        %v209 = vsub.f32 1.0, %v202
        %v210 = vlog2.pop %v209
        %v211 = vmul.f32 %v210, 0.6931472
        %v212 = vmax.f32 %v211, -100.0
        %v213 = vsub.f32 %v208, %v212
        %v214 = vmul.f32 %v205, %v213
        %v215 = vadd.f32 %v212, %v214
        %v216 = vsub.f32 0.0, %v215
        %v217 = vstv %s199
        %vm218 = vcmp.lt.s32.totalorder %v201, %v217
        %v219 = vsel %vm218, %v216, 0.0
        %v220 = vadd.f32 %v219, 0.0
        %v221 = vadd.f32 %v220, 0.0
        %222 = vst [vmem:[%s195] sm:$0xff] %v221
        %s223 = sand.u32 %s82, 1
        %s224 = scalar_lea.sflag [#allocation4], %s223
        %s225 = sand.u32 %s82, 1
        %s226 = smul.addr %s225, 8
        %s227 = scalar_lea.vmem [#allocation7], %s226
        // Predicated region
        $region37: #{tpu_custom_call.1} parent=27 // pred_check
          %p228 = pneg %p92
        $region38: #{tpu_custom_call.1} parent=27 // pred_check_branch
          %230 = sbr.rel (%p228) target = $region40
        $region39: #{tpu_custom_call.1} parent=27 // pred_region
          %s232 = ssub.s32 128, 128
          %233 = vsyncadd %s224, %s232
          %s234 = smul.addr %s22, 128
          %s235 = scalar_lea.hbm %s2, %s234
          %s237 = sshll.u32 %s227, 4
          %s238 = int_to_ptr.vmem [resolvable:$true] %s237
          %240 = dma.vmem_to_hbm [thread:$0]  %s238, 128, %s235, %s224
        $region40: #{tpu_custom_call.1} parent=27 // pred_fallthru
          _
      $region28: #{tpu_custom_call.1} parent=5 // pred_fallthru
        _
      %p241 = scmp.le.s32.totalorder 2, %s17
      // Predicated region
      $region41: #{tpu_custom_call.1} parent=5 // pred_check
        %p242 = pneg %p241
      $region42: #{tpu_custom_call.1} parent=5 // pred_check_branch
        %244 = sbr.rel (%p242) target = $region44
      $region43: #{tpu_custom_call.1} parent=5 // pred_region
        %s245 = ssub.s32 %s17, 2
        // Predicated region
        $region45: #{tpu_custom_call.1} parent=43 // pred_check
          %p246 = pneg %p98
        $region46: #{tpu_custom_call.1} parent=43 // pred_check_branch
          %248 = sbr.rel (%p246) target = $region48
        $region47: #{tpu_custom_call.1} parent=43 // pred_region
          %s249 = sand.u32 %s83, 1
          %s250 = scalar_lea.sflag [#allocation4], %s249
          %s251 = sand.u32 %s83, 1
          %s252 = smul.addr %s251, 8
          %s253 = scalar_lea.vmem [#allocation7], %s252
          %254 = dma.done %s250, 128
        $region48: #{tpu_custom_call.1} parent=43 // pred_fallthru
          _
      $region44: #{tpu_custom_call.1} parent=5 // pred_fallthru
        _
    $region6: #{tpu_custom_call.1} parent=1 // loop_footer
      %s21 = sadd.s32 1, %s17
    $region7: #{tpu_custom_call.1} parent=1 // loop_footer_branch
      %16 = sbr.rel target = $region3
    $region8: #{tpu_custom_call.1} parent=1 // loop_exit
      _
    %255 = vsyncpa [#allocation3], 1
    %s256 = scalar_lea.sflag [#allocation3], 1
    %257 = vsyncpa %s256, 1
    %258 = vsyncpa [#allocation6], 1
    %s259 = scalar_lea.sflag [#allocation6], 1
    %260 = vsyncpa %s259, 1
    %261 = vsyncpa [#allocation4], 1
    %s262 = scalar_lea.sflag [#allocation4], 1
    %263 = vsyncpa %s262, 1

</llo_original>
